<compile_context>
chip_gen: v6e
topology: v6e:2x2x1
jax: 0.10.0
libtpu: 0.0.40
codegen_flags: <defaults>
</compile_context>

<pallas_src>
import jax
import jax.numpy as jnp
from jax.experimental import pallas as pl
from jax.experimental.pallas import tpu as pltpu


def _relu_square_kernel(x_ref, o_ref):
    x = x_ref[...]
    r = jnp.maximum(x, 0)       # relu; scalar 0 avoids a needless zero splat
    o_ref[...] = r * r          # relu(x)^2 in the storage dtype (PyTorch semantics)


_LANE = 128
_SMALL_VMEM_BYTES = 1 * 1024 * 1024   # single whole-array block only below this (in+out)
_MIN_GRID_STEPS = 4                   # >=2 steps per TensorCore on v7x megacore


def _sublane_multiple(dtype) -> int:
    # Packed dtypes need bigger sublane multiples: f32 -> 8, bf16 -> 16, int8/fp8 -> 32.
    return {4: 8, 2: 16, 1: 32}.get(jnp.dtype(dtype).itemsize, 8)


def _hw_budgets():
    """Return (target_block_bytes, vmem_limit_bytes), gated on physical VMEM size."""
    cap = None
    try:
        cap = getattr(pltpu.get_tpu_info(), "vmem_capacity_bytes", None)
    except Exception:
        cap = None
    if cap is not None and cap >= 100 * 1024 * 1024:
        # v5e / v6e: 128 MiB physical VMEM -> roomier 6 MiB blocks, 64 MiB scoped limit.
        return 6 * 1024 * 1024, 64 * 1024 * 1024
    # v7x (64 MiB per TC) or unknown: ~4 MiB blocks, 32 MiB limit (headroom for scratch).
    return 4 * 1024 * 1024, 32 * 1024 * 1024


def square_pallas(x: jax.Array, *, donate_input: bool = False) -> jax.Array:
    """y = relu(x)**2, elementwise; same shape/dtype as x."""
    orig_shape = x.shape
    dtype = x.dtype
    total = x.size
    if total == 0:
        return x
    if x.ndim < 2:
        # Give the TPU a 2-D view for 0-D / 1-D inputs.
        return square_pallas(x.reshape(1, total),
                             donate_input=donate_input).reshape(orig_shape)

    itemsize = jnp.dtype(dtype).itemsize
    sub = _sublane_multiple(dtype)
    io_alias = {0: 0} if donate_input else {}
    target_block_bytes, vmem_limit = _hw_budgets()

    # ---------------- tiny-tensor path: one whole-array VMEM block ----------------
    # Full-array block shapes are exempt from the (8,128) divisibility rule, so the
    # original NCHW tensor goes straight in: no pad, no reshape, no trailing slice.
    lead = 1
    for d in orig_shape[:-2]:
        lead *= d
    padded_elems = (lead
                    * pl.cdiv(orig_shape[-2], sub) * sub
                    * pl.cdiv(orig_shape[-1], _LANE) * _LANE)
    if padded_elems * itemsize * 2 <= _SMALL_VMEM_BYTES:   # x2: input + output
        return pl.pallas_call(
            _relu_square_kernel,
            out_shape=jax.ShapeDtypeStruct(orig_shape, dtype),
            input_output_aliases=io_alias,
            compiler_params=pltpu.CompilerParams(vmem_limit_bytes=vmem_limit),
        )(x)

    # ---------------- tiled path: lane-dense 2-D slab, pipelined grid ----------------
    # Prefer a wide lane width (multiple of 128) that divides the element count, so
    # the common path is a free flat reshape with unmasked full-lane stores.  If no
    # such width exists, keep the true last dim and rely on Pallas's ragged-block
    # masking (no extra jnp.pad / [:total] HBM passes).
    width = 0
    for cand in (4096, 2048, 1024, 512, 256, 128):
        if total % cand == 0:
            width = cand
            break

    if width:
        rows, cols = total // width, width
    else:
        cols = orig_shape[-1]
        rows = total // cols
    x2d = x.reshape(rows, cols)

    row_block_bytes = cols * itemsize * sub
    if row_block_bytes <= target_block_bytes:
        # 1-D grid over rows; block last dim == full last dim (layout-exempt).
        block_rows = max(sub, (target_block_bytes // (cols * itemsize)) // sub * sub)
        block_rows = min(block_rows, pl.cdiv(rows, sub) * sub)
        # Guarantee >= _MIN_GRID_STEPS grid steps (>=2 per TC on v7x, better
        # DMA/compute overlap everywhere) whenever the row count allows it.
        if pl.cdiv(rows, block_rows) < _MIN_GRID_STEPS:
            cand_rows = max(sub, pl.cdiv(pl.cdiv(rows, _MIN_GRID_STEPS), sub) * sub)
            block_rows = min(block_rows, cand_rows)
        if block_rows > rows:
            block_rows = rows          # full dim -> exempt from sublane multiple rule
        grid = (pl.cdiv(rows, block_rows),)
        in_specs = [pl.BlockSpec((block_rows, cols), lambda i: (i, 0))]
        out_specs = pl.BlockSpec((block_rows, cols), lambda i: (i, 0))
        dims = ("parallel",)
    else:
        # Very wide last dim: tile both axes; ragged edges are masked by Pallas.
        block_cols = max(_LANE,
                         (target_block_bytes // (sub * itemsize)) // _LANE * _LANE)
        block_cols = min(block_cols, pl.cdiv(cols, _LANE) * _LANE)
        block_rows = min(sub, rows)
        grid = (pl.cdiv(rows, block_rows), pl.cdiv(cols, block_cols))
        in_specs = [pl.BlockSpec((block_rows, block_cols), lambda i, j: (i, j))]
        out_specs = pl.BlockSpec((block_rows, block_cols), lambda i, j: (i, j))
        dims = ("parallel", "parallel")

    out2d = pl.pallas_call(
        _relu_square_kernel,
        out_shape=jax.ShapeDtypeStruct((rows, cols), dtype),
        grid_spec=pltpu.PrefetchScalarGridSpec(
            num_scalar_prefetch=0,
            grid=grid,
            in_specs=in_specs,
            out_specs=out_specs,
        ),
        input_output_aliases=io_alias,
        compiler_params=pltpu.CompilerParams(
            dimension_semantics=dims,
            vmem_limit_bytes=vmem_limit),
    )(x2d)

    return out2d.reshape(orig_shape)


def square_ref(x: jax.Array) -> jax.Array:
    """Pure-JAX reference matching the PyTorch _square forward semantics."""
    r = jnp.maximum(x, 0.0)
    return r * r


if __name__ == "__main__":
    key = jax.random.PRNGKey(0)
    # Small NCHW activation tensor (whole-array single-block path).
    x = jax.random.normal(key, (2, 4, 16, 16), dtype=jnp.float32) * 3.0
    y = square_pallas(x)
    jax.block_until_ready(y)
    assert y.shape == x.shape and y.dtype == x.dtype
    assert jnp.allclose(y, square_ref(x), atol=1e-6, rtol=1e-6)

    # Lane-dense tiled path (8 MiB f32, >=4 parallel pipelined grid steps).
    x_big = jax.random.normal(jax.random.PRNGKey(1), (8, 64, 32, 128),
                              dtype=jnp.float32) * 3.0
    y_big = square_pallas(x_big)
    jax.block_until_ready(y_big)
    assert jnp.allclose(y_big, square_ref(x_big), atol=1e-6, rtol=1e-6)

    # Ragged path: element count not a multiple of 128 (no pad / trim HBM passes).
    x_odd = jax.random.normal(jax.random.PRNGKey(2), (3, 11, 33, 129),
                              dtype=jnp.float32) * 3.0
    y_odd = square_pallas(x_odd)
    jax.block_until_ready(y_odd)
    assert jnp.allclose(y_odd, square_ref(x_odd), atol=1e-6, rtol=1e-6)

    print("KERNEL_OK")
</pallas_src>

<mosaic_0001>
module attributes {stable_mosaic.version = 11 : i64} {
  func.func @_relu_square_kernel(%arg0: memref<2x4x16x16xf32, #tpu.memory_space<vmem>>, %arg1: memref<2x4x16x16xf32, #tpu.memory_space<vmem>>) attributes {dimension_semantics = [], scalar_prefetch = 0 : i64, scratch_operands = 0 : i64, tpu.core_type = #tpu.core_type<tc>} {
    %c0 = arith.constant 0 : index
    %c0_0 = arith.constant 0 : index
    %c0_1 = arith.constant 0 : index
    %c0_2 = arith.constant 0 : index
    %0 = vector.load %arg0[%c0, %c0_0, %c0_1, %c0_2] : memref<2x4x16x16xf32, #tpu.memory_space<vmem>>, vector<2x4x16x16xf32>
    %cst = arith.constant 0.000000e+00 : f32
    %1 = vector.broadcast %cst : f32 to vector<2x4x16x16xf32>
    %2 = arith.maximumf %0, %1 : vector<2x4x16x16xf32>
    %3 = arith.mulf %2, %2 : vector<2x4x16x16xf32>
    %c0_3 = arith.constant 0 : index
    %c0_4 = arith.constant 0 : index
    %c0_5 = arith.constant 0 : index
    %c0_6 = arith.constant 0 : index
    %4 = vector.load %arg1[%c0_3, %c0_4, %c0_5, %c0_6] : memref<2x4x16x16xf32, #tpu.memory_space<vmem>>, vector<2x4x16x16xf32>
    tpu.vector_store %arg1[%c0_3, %c0_4, %c0_5, %c0_6], %3 {strides = array<i32>} : memref<2x4x16x16xf32, #tpu.memory_space<vmem>>, vector<2x4x16x16xf32>,
    return
  }
}

</mosaic_0001>

<llo_original>
// kernel: tpu_custom_call.1
$region0: #{tpu_custom_call.1}
  #allocation0 [shape = 'u32[]', space=smem, size = 0x4, offset = 0x4, fixed_abs, tag = 'smem constant byte address 0x4 - core index']
  #allocation1 [shape = 'u32[144,128]{1,0:T(1,128)}', space=vmem, size = 0x12000, scoped, tag = 'internal scratch']
  %s0 = inlined_call_operand.hbm [shape: f32[2,4,16,16], index: 0, kind: input, shape index: {}]
  %s1 = inlined_call_operand.hbm [shape: f32[2,4,16,16], index: 1, kind: output, shape index: {}]
  %s2 = sld [smem:[#allocation0]]
  $region18: #{tpu_custom_call.1} parent=0
    _
  %s4 = ssub.s32 1, %s2
  %s5 = scalar_select 0, %s4, %s2
  $region1: #{tpu_custom_call.1} parent=0
    #allocation2 [shape = 'u8[65536]{0}', space=vmem, size = 0x10000, scoped, tag = 'input window, operand 0, single buffered']
    #allocation3 [shape = 's32[1]{0}', space=sflag, size = 0x4, scoped, tag = 'scoped memory for tpu_custom_call.1']
    #allocation4 [shape = 's32[1]{0}', space=sflag, size = 0x4, scoped, tag = 'scoped memory for tpu_custom_call.1']
    #allocation5 [shape = 'u8[65536]{0}', space=vmem, size = 0x10000, scoped, tag = 'output window, operand 0, single buffered']
    %6 = vsyncpa [#allocation3], 0
    %7 = vsyncpa [#allocation4], 0
    // Predicated region
    $region2: #{tpu_custom_call.1} parent=1 // pred_check
      _
    $region3: #{tpu_custom_call.1} parent=1 // pred_check_branch
      %9 = sbr.rel (0) target = $region5
    $region4: #{tpu_custom_call.1} parent=1 // pred_region
      %s11 = ssub.s32 2048, 2048
      %12 = vsyncadd [#allocation3], %s11
      %s13 = sshll.u32 [#allocation2], 4
      %s14 = int_to_ptr.vmem [resolvable:$true] %s13
      %19 = dma.hbm_to_vmem [thread:$0]  %s0, 2048, %s14, [#allocation3], 128, 128, 8
    $region5: #{tpu_custom_call.1} parent=1 // pred_fallthru
      _
    // Predicated region
    $region6: #{tpu_custom_call.1} parent=1 // pred_check
      _
    $region7: #{tpu_custom_call.1} parent=1 // pred_check_branch
      %21 = sbr.rel (0) target = $region9
    $region8: #{tpu_custom_call.1} parent=1 // pred_region
      %22 = dma.done [#allocation3], 2048
    $region9: #{tpu_custom_call.1} parent=1 // pred_fallthru
      _
    %v23 = vld [vmem:[#allocation2] sm:$0xff]
    %v24 = vld [vmem:[#allocation2 + $0x8] sm:$0xff]
    %v25 = vld [vmem:[#allocation2 + $0x10] sm:$0xff]
    %v26 = vld [vmem:[#allocation2 + $0x18] sm:$0xff]
    %v27 = vld [vmem:[#allocation2 + $0x20] sm:$0xff]
    %v28 = vld [vmem:[#allocation2 + $0x28] sm:$0xff]
    %v29 = vld [vmem:[#allocation2 + $0x30] sm:$0xff]
    %v30 = vld [vmem:[#allocation2 + $0x38] sm:$0xff]
    %v31 = vld [vmem:[#allocation2 + $0x40] sm:$0xff]
    %v32 = vld [vmem:[#allocation2 + $0x48] sm:$0xff]
    %v33 = vld [vmem:[#allocation2 + $0x50] sm:$0xff]
    %v34 = vld [vmem:[#allocation2 + $0x58] sm:$0xff]
    %v35 = vld [vmem:[#allocation2 + $0x60] sm:$0xff]
    %v36 = vld [vmem:[#allocation2 + $0x68] sm:$0xff]
    %v37 = vld [vmem:[#allocation2 + $0x70] sm:$0xff]
    %v38 = vld [vmem:[#allocation2 + $0x78] sm:$0xff]
    %v39 = vmax.f32 %v23, 0.0
    %v40 = vmax.f32 %v24, 0.0
    %v41 = vmax.f32 %v25, 0.0
    %v42 = vmax.f32 %v26, 0.0
    %v43 = vmax.f32 %v27, 0.0
    %v44 = vmax.f32 %v28, 0.0
    %v45 = vmax.f32 %v29, 0.0
    %v46 = vmax.f32 %v30, 0.0
    %v47 = vmax.f32 %v31, 0.0
    %v48 = vmax.f32 %v32, 0.0
    %v49 = vmax.f32 %v33, 0.0
    %v50 = vmax.f32 %v34, 0.0
    %v51 = vmax.f32 %v35, 0.0
    %v52 = vmax.f32 %v36, 0.0
    %v53 = vmax.f32 %v37, 0.0
    %v54 = vmax.f32 %v38, 0.0
    %v55 = vmul.f32 %v39, %v39
    %v56 = vmul.f32 %v40, %v40
    %v57 = vmul.f32 %v41, %v41
    %v58 = vmul.f32 %v42, %v42
    %v59 = vmul.f32 %v43, %v43
    %v60 = vmul.f32 %v44, %v44
    %v61 = vmul.f32 %v45, %v45
    %v62 = vmul.f32 %v46, %v46
    %v63 = vmul.f32 %v47, %v47
    %v64 = vmul.f32 %v48, %v48
    %v65 = vmul.f32 %v49, %v49
    %v66 = vmul.f32 %v50, %v50
    %v67 = vmul.f32 %v51, %v51
    %v68 = vmul.f32 %v52, %v52
    %v69 = vmul.f32 %v53, %v53
    %v70 = vmul.f32 %v54, %v54
    %vm71 = vcmask 130048
    %72 = vst.msk [vmem:[#allocation5] sm:$0xff] %vm71, %v55
    %73 = vst.msk [vmem:[#allocation5 + $0x8] sm:$0xff] %vm71, %v56
    %74 = vst.msk [vmem:[#allocation5 + $0x10] sm:$0xff] %vm71, %v57
    %75 = vst.msk [vmem:[#allocation5 + $0x18] sm:$0xff] %vm71, %v58
    %76 = vst.msk [vmem:[#allocation5 + $0x20] sm:$0xff] %vm71, %v59
    %77 = vst.msk [vmem:[#allocation5 + $0x28] sm:$0xff] %vm71, %v60
    %78 = vst.msk [vmem:[#allocation5 + $0x30] sm:$0xff] %vm71, %v61
    %79 = vst.msk [vmem:[#allocation5 + $0x38] sm:$0xff] %vm71, %v62
    %80 = vst.msk [vmem:[#allocation5 + $0x40] sm:$0xff] %vm71, %v63
    %81 = vst.msk [vmem:[#allocation5 + $0x48] sm:$0xff] %vm71, %v64
    %82 = vst.msk [vmem:[#allocation5 + $0x50] sm:$0xff] %vm71, %v65
    %83 = vst.msk [vmem:[#allocation5 + $0x58] sm:$0xff] %vm71, %v66
    %84 = vst.msk [vmem:[#allocation5 + $0x60] sm:$0xff] %vm71, %v67
    %85 = vst.msk [vmem:[#allocation5 + $0x68] sm:$0xff] %vm71, %v68
    %86 = vst.msk [vmem:[#allocation5 + $0x70] sm:$0xff] %vm71, %v69
    %87 = vst.msk [vmem:[#allocation5 + $0x78] sm:$0xff] %vm71, %v70
    // Predicated region
    $region10: #{tpu_custom_call.1} parent=1 // pred_check
      _
    $region11: #{tpu_custom_call.1} parent=1 // pred_check_branch
      %89 = sbr.rel (0) target = $region13
    $region12: #{tpu_custom_call.1} parent=1 // pred_region
      %s91 = ssub.s32 2048, 2048
      %92 = vsyncadd [#allocation4], %s91
      %s93 = sshll.u32 [#allocation5], 4
      %s94 = int_to_ptr.vmem [resolvable:$true] %s93
      %99 = dma.vmem_to_hbm [thread:$0]  %s94, 2048, %s1, [#allocation4], 128, 128, 8
    $region13: #{tpu_custom_call.1} parent=1 // pred_fallthru
      _
    // Predicated region
    $region14: #{tpu_custom_call.1} parent=1 // pred_check
      _
    $region15: #{tpu_custom_call.1} parent=1 // pred_check_branch
      %101 = sbr.rel (0) target = $region17
    $region16: #{tpu_custom_call.1} parent=1 // pred_region
      %102 = dma.done [#allocation4], 2048
    $region17: #{tpu_custom_call.1} parent=1 // pred_fallthru
      _
    %103 = vsyncpa [#allocation3], 1
    %104 = vsyncpa [#allocation4], 1

</llo_original>
